<compile_context>
chip_gen: v7x
topology: tpu7x:2x2x1
jax: 0.10.0
libtpu: 0.0.40
codegen_flags: <defaults>
</compile_context>

<pallas_src>
import jax
import jax.numpy as jnp
from jax.experimental import pallas as pl
from jax.experimental.pallas import tpu as pltpu


def _make_vpu_kernel(C):
    """Small-C path: channel mix as SMEM-scalar broadcast FMAs on the VPU."""

    def kernel(x_ref, wr_ref, br_ref, wa_ref, ba_ref, o_ref):
        # x_ref:  (1, C, TS) VMEM  input tile (lane-dense spatial last dim)
        # wr_ref: (C, C)     SMEM  residual-branch 1x1-conv weight (out, in)
        # br_ref: (C,)       SMEM  residual-branch bias
        # wa_ref: (C, C)     SMEM  attention-branch weight, PRE-SCALED by gamma
        # ba_ref: (C,)       SMEM  attention-branch bias,   PRE-SCALED by gamma
        # o_ref:  (1, C, TS) VMEM
        x = x_ref[0]                                    # (C, TS)
        xi = [x[i:i + 1, :] for i in range(C)]          # C rows, each (1, TS)
        rows = []
        for co in range(C):
            res = xi[0] * wr_ref[co, 0]
            att = xi[0] * wa_ref[co, 0]
            for ci in range(1, C):
                res = res + xi[ci] * wr_ref[co, ci]
                att = att + xi[ci] * wa_ref[co, ci]
            res = res + br_ref[co]
            att = att + (ba_ref[co] + 1.0)              # = gamma*att_raw + 1
            rows.append(res * att)
        o_ref[0] = jnp.concatenate(rows, axis=0)        # one lane-dense store

    return kernel


def _make_mxu_kernel(C):
    """General path: both branches fused into one MXU matmul (no transpose)."""

    def kernel(x_ref, w_cat_ref, b_cat_ref, o_ref):
        # x_ref:     (1, C, TS) VMEM
        # w_cat_ref: (2C, C)    VMEM  [Wr ; gamma*Wa]   (grid-invariant)
        # b_cat_ref: (2C, 1)    VMEM  [br ; gamma*ba]
        # o_ref:     (1, C, TS) VMEM
        x = x_ref[0]                                    # (C, TS)
        y = jnp.dot(w_cat_ref[...], x,
                    preferred_element_type=jnp.float32) + b_cat_ref[...]
        res = y[:C, :]
        att = y[C:, :]
        o_ref[0] = (res * (att + 1.0)).astype(o_ref.dtype)

    return kernel


def res_module_forward(x_nchw, w_res, b_res, w_att, b_att, gamma, *, ts=2048):
    """ResModule forward. x_nchw: (N, C, H, W) float32 -> (N, C, H, W) float32."""
    N, C, H, W = x_nchw.shape
    HW = H * W

    # Free (contiguous) reshape: spatial becomes the lane-dense last dim.
    x3 = x_nchw.reshape(N, C, HW).astype(jnp.float32)

    # Fold gamma into the attention branch once, off the hot path:
    #   out = res * (gamma*att + 1) == res * (att' + 1), Wa' = g*Wa, ba' = g*ba.
    g = jnp.float32(gamma)
    wr = w_res.astype(jnp.float32)
    br = b_res.reshape(C).astype(jnp.float32)
    wa = (w_att * g).astype(jnp.float32)
    ba = (b_att.reshape(C) * g).astype(jnp.float32)

    # Lane-dense spatial tiling: tile size is a multiple of 128; pad HW if needed.
    hw128 = ((HW + 127) // 128) * 128
    ts = max(128, min((ts // 128) * 128, hw128))
    hw_pad = ((HW + ts - 1) // ts) * ts
    if hw_pad != HW:
        x3 = jnp.pad(x3, ((0, 0), (0, 0), (0, hw_pad - HW)))

    grid = (N, hw_pad // ts)
    x_spec = pl.BlockSpec((1, C, ts), lambda n, s: (n, 0, s))
    o_spec = pl.BlockSpec((1, C, ts), lambda n, s: (n, 0, s))

    if C < 8:
        # Tiny channel count: VPU broadcast-FMA path, weights/biases in SMEM.
        kernel = _make_vpu_kernel(C)
        smem = pl.BlockSpec(memory_space=pltpu.MemorySpace.SMEM)
        in_specs = [x_spec, smem, smem, smem, smem]
        args = (x3, wr, br, wa, ba)
    else:
        # Fused single matmul: [Wr ; gamma*Wa] @ x_tile -> (2C, TS).
        w_cat = jnp.concatenate([wr, wa], axis=0)                   # (2C, C)
        b_cat = jnp.concatenate([br, ba], axis=0).reshape(2 * C, 1)  # (2C, 1)
        kernel = _make_mxu_kernel(C)
        in_specs = [
            x_spec,
            pl.BlockSpec((2 * C, C), lambda n, s: (0, 0)),  # grid-invariant
            pl.BlockSpec((2 * C, 1), lambda n, s: (0, 0)),
        ]
        args = (x3, w_cat, b_cat)

    out = pl.pallas_call(
        kernel,
        out_shape=jax.ShapeDtypeStruct((N, C, hw_pad), jnp.float32),
        grid_spec=pltpu.PrefetchScalarGridSpec(
            num_scalar_prefetch=0,
            grid=grid,
            in_specs=in_specs,
            out_specs=o_spec,
        ),
        compiler_params=pltpu.CompilerParams(
            dimension_semantics=("parallel", "parallel"),
            vmem_limit_bytes=48 * 1024 * 1024,
        ),
    )(*args)

    if hw_pad != HW:
        out = out[:, :, :HW]
    return out.reshape(N, C, H, W)


def reference_forward(x_nchw, w_res, b_res, w_att, b_att, gamma):
    N, C, H, W = x_nchw.shape
    xf = jnp.transpose(x_nchw, (0, 2, 3, 1)).reshape(-1, C)
    res = xf @ w_res.T + b_res
    att = xf @ w_att.T + b_att
    out = res * (gamma * att + 1.0)
    return jnp.transpose(out.reshape(N, H, W, C), (0, 3, 1, 2))


if __name__ == "__main__":
    key = jax.random.PRNGKey(0)
    k_x, k_wr, k_br, k_wa, k_ba = jax.random.split(key, 5)

    N, C, H, W = 2, 4, 16, 16
    x = jax.random.normal(k_x, (N, C, H, W), jnp.float32)

    # deterministic synthetic parameters for the two 1x1-conv submodules
    w_res = jax.random.normal(k_wr, (C, C), jnp.float32) * 0.1
    b_res = jax.random.normal(k_br, (C,), jnp.float32) * 0.1
    w_att = jax.random.normal(k_wa, (C, C), jnp.float32) * 0.1
    b_att = jax.random.normal(k_ba, (C,), jnp.float32) * 0.1

    # ResModule.__init__: gamma = orthogonal_((1,1)) + (m+1) = 1 + 1 = 2
    # TODO(synk): pass the actual trained gamma scalar at inference time.
    gamma = 2.0

    out = res_module_forward(x, w_res, b_res, w_att, b_att, gamma)
    out = jax.block_until_ready(out)

    ref = reference_forward(x, w_res, b_res, w_att, b_att, gamma)
    assert out.shape == (N, C, H, W)
    assert jnp.allclose(out, ref, atol=1e-5, rtol=1e-5), "mismatch vs reference"

    print("KERNEL_OK")
</pallas_src>

<mosaic_0001>
module attributes {stable_mosaic.version = 11 : i64} {
  func.func @kernel(%arg0: i32, %arg1: i32, %arg2: memref<1x4x256xf32, #tpu.memory_space<vmem>>, %arg3: memref<4x4xf32, #tpu.memory_space<smem>>, %arg4: memref<4xf32, #tpu.memory_space<smem>>, %arg5: memref<4x4xf32, #tpu.memory_space<smem>>, %arg6: memref<4xf32, #tpu.memory_space<smem>>, %arg7: memref<1x4x256xf32, #tpu.memory_space<vmem>>) attributes {dimension_semantics = [#tpu.dimension_semantics<parallel>, #tpu.dimension_semantics<parallel>], iteration_bounds = array<i64: 2, 1>, scalar_prefetch = 0 : i64, scratch_operands = 0 : i64, tpu.core_type = #tpu.core_type<tc>, window_params = [{transform_indices = @transform_0, window_bounds = array<i64: 1, 4, 256>}, {transform_indices = @transform_1, window_bounds = array<i64: 4, 4>}, {transform_indices = @transform_2, window_bounds = array<i64: 4>}, {transform_indices = @transform_3, window_bounds = array<i64: 4, 4>}, {transform_indices = @transform_4, window_bounds = array<i64: 4>}, {transform_indices = @transform_5, window_bounds = array<i64: 1, 4, 256>}]} {
    %c0 = arith.constant 0 : index
    %c0_0 = arith.constant 0 : index
    %c0_1 = arith.constant 0 : index
    %0 = vector.load %arg2[%c0, %c0_0, %c0_1] : memref<1x4x256xf32, #tpu.memory_space<vmem>>, vector<1x4x256xf32>
    %1 = vector.shape_cast %0 : vector<1x4x256xf32> to vector<4x256xf32>
    %2 = vector.extract_strided_slice %1 {offsets = [0, 0], sizes = [1, 256], strides = [1, 1]} : vector<4x256xf32> to vector<1x256xf32>
    %3 = vector.extract_strided_slice %1 {offsets = [1, 0], sizes = [1, 256], strides = [1, 1]} : vector<4x256xf32> to vector<1x256xf32>
    %4 = vector.extract_strided_slice %1 {offsets = [2, 0], sizes = [1, 256], strides = [1, 1]} : vector<4x256xf32> to vector<1x256xf32>
    %5 = vector.extract_strided_slice %1 {offsets = [3, 0], sizes = [1, 256], strides = [1, 1]} : vector<4x256xf32> to vector<1x256xf32>
    %c0_2 = arith.constant 0 : index
    %c0_3 = arith.constant 0 : index
    %6 = memref.load %arg3[%c0_2, %c0_3] : memref<4x4xf32, #tpu.memory_space<smem>>
    %7 = vector.broadcast %6 : f32 to vector<1x256xf32>
    %8 = arith.mulf %2, %7 : vector<1x256xf32>
    %c0_4 = arith.constant 0 : index
    %c0_5 = arith.constant 0 : index
    %9 = memref.load %arg5[%c0_4, %c0_5] : memref<4x4xf32, #tpu.memory_space<smem>>
    %10 = vector.broadcast %9 : f32 to vector<1x256xf32>
    %11 = arith.mulf %2, %10 : vector<1x256xf32>
    %c0_6 = arith.constant 0 : index
    %c1 = arith.constant 1 : index
    %12 = memref.load %arg3[%c0_6, %c1] : memref<4x4xf32, #tpu.memory_space<smem>>
    %13 = vector.broadcast %12 : f32 to vector<1x256xf32>
    %14 = arith.mulf %3, %13 : vector<1x256xf32>
    %15 = arith.addf %8, %14 : vector<1x256xf32>
    %c0_7 = arith.constant 0 : index
    %c1_8 = arith.constant 1 : index
    %16 = memref.load %arg5[%c0_7, %c1_8] : memref<4x4xf32, #tpu.memory_space<smem>>
    %17 = vector.broadcast %16 : f32 to vector<1x256xf32>
    %18 = arith.mulf %3, %17 : vector<1x256xf32>
    %19 = arith.addf %11, %18 : vector<1x256xf32>
    %c0_9 = arith.constant 0 : index
    %c2 = arith.constant 2 : index
    %20 = memref.load %arg3[%c0_9, %c2] : memref<4x4xf32, #tpu.memory_space<smem>>
    %21 = vector.broadcast %20 : f32 to vector<1x256xf32>
    %22 = arith.mulf %4, %21 : vector<1x256xf32>
    %23 = arith.addf %15, %22 : vector<1x256xf32>
    %c0_10 = arith.constant 0 : index
    %c2_11 = arith.constant 2 : index
    %24 = memref.load %arg5[%c0_10, %c2_11] : memref<4x4xf32, #tpu.memory_space<smem>>
    %25 = vector.broadcast %24 : f32 to vector<1x256xf32>
    %26 = arith.mulf %4, %25 : vector<1x256xf32>
    %27 = arith.addf %19, %26 : vector<1x256xf32>
    %c0_12 = arith.constant 0 : index
    %c3 = arith.constant 3 : index
    %28 = memref.load %arg3[%c0_12, %c3] : memref<4x4xf32, #tpu.memory_space<smem>>
    %29 = vector.broadcast %28 : f32 to vector<1x256xf32>
    %30 = arith.mulf %5, %29 : vector<1x256xf32>
    %31 = arith.addf %23, %30 : vector<1x256xf32>
    %c0_13 = arith.constant 0 : index
    %c3_14 = arith.constant 3 : index
    %32 = memref.load %arg5[%c0_13, %c3_14] : memref<4x4xf32, #tpu.memory_space<smem>>
    %33 = vector.broadcast %32 : f32 to vector<1x256xf32>
    %34 = arith.mulf %5, %33 : vector<1x256xf32>
    %35 = arith.addf %27, %34 : vector<1x256xf32>
    %c0_15 = arith.constant 0 : index
    %36 = memref.load %arg4[%c0_15] : memref<4xf32, #tpu.memory_space<smem>>
    %37 = vector.broadcast %36 : f32 to vector<1x256xf32>
    %38 = arith.addf %31, %37 : vector<1x256xf32>
    %c0_16 = arith.constant 0 : index
    %39 = memref.load %arg6[%c0_16] : memref<4xf32, #tpu.memory_space<smem>>
    %cst = arith.constant 1.000000e+00 : f32
    %40 = arith.addf %39, %cst : f32
    %41 = vector.broadcast %40 : f32 to vector<1x256xf32>
    %42 = arith.addf %35, %41 : vector<1x256xf32>
    %43 = arith.mulf %38, %42 : vector<1x256xf32>
    %c1_17 = arith.constant 1 : index
    %c0_18 = arith.constant 0 : index
    %44 = memref.load %arg3[%c1_17, %c0_18] : memref<4x4xf32, #tpu.memory_space<smem>>
    %45 = vector.broadcast %44 : f32 to vector<1x256xf32>
    %46 = arith.mulf %2, %45 : vector<1x256xf32>
    %c1_19 = arith.constant 1 : index
    %c0_20 = arith.constant 0 : index
    %47 = memref.load %arg5[%c1_19, %c0_20] : memref<4x4xf32, #tpu.memory_space<smem>>
    %48 = vector.broadcast %47 : f32 to vector<1x256xf32>
    %49 = arith.mulf %2, %48 : vector<1x256xf32>
    %c1_21 = arith.constant 1 : index
    %c1_22 = arith.constant 1 : index
    %50 = memref.load %arg3[%c1_21, %c1_22] : memref<4x4xf32, #tpu.memory_space<smem>>
    %51 = vector.broadcast %50 : f32 to vector<1x256xf32>
    %52 = arith.mulf %3, %51 : vector<1x256xf32>
    %53 = arith.addf %46, %52 : vector<1x256xf32>
    %c1_23 = arith.constant 1 : index
    %c1_24 = arith.constant 1 : index
    %54 = memref.load %arg5[%c1_23, %c1_24] : memref<4x4xf32, #tpu.memory_space<smem>>
    %55 = vector.broadcast %54 : f32 to vector<1x256xf32>
    %56 = arith.mulf %3, %55 : vector<1x256xf32>
    %57 = arith.addf %49, %56 : vector<1x256xf32>
    %c1_25 = arith.constant 1 : index
    %c2_26 = arith.constant 2 : index
    %58 = memref.load %arg3[%c1_25, %c2_26] : memref<4x4xf32, #tpu.memory_space<smem>>
    %59 = vector.broadcast %58 : f32 to vector<1x256xf32>
    %60 = arith.mulf %4, %59 : vector<1x256xf32>
    %61 = arith.addf %53, %60 : vector<1x256xf32>
    %c1_27 = arith.constant 1 : index
    %c2_28 = arith.constant 2 : index
    %62 = memref.load %arg5[%c1_27, %c2_28] : memref<4x4xf32, #tpu.memory_space<smem>>
    %63 = vector.broadcast %62 : f32 to vector<1x256xf32>
    %64 = arith.mulf %4, %63 : vector<1x256xf32>
    %65 = arith.addf %57, %64 : vector<1x256xf32>
    %c1_29 = arith.constant 1 : index
    %c3_30 = arith.constant 3 : index
    %66 = memref.load %arg3[%c1_29, %c3_30] : memref<4x4xf32, #tpu.memory_space<smem>>
    %67 = vector.broadcast %66 : f32 to vector<1x256xf32>
    %68 = arith.mulf %5, %67 : vector<1x256xf32>
    %69 = arith.addf %61, %68 : vector<1x256xf32>
    %c1_31 = arith.constant 1 : index
    %c3_32 = arith.constant 3 : index
    %70 = memref.load %arg5[%c1_31, %c3_32] : memref<4x4xf32, #tpu.memory_space<smem>>
    %71 = vector.broadcast %70 : f32 to vector<1x256xf32>
    %72 = arith.mulf %5, %71 : vector<1x256xf32>
    %73 = arith.addf %65, %72 : vector<1x256xf32>
    %c1_33 = arith.constant 1 : index
    %74 = memref.load %arg4[%c1_33] : memref<4xf32, #tpu.memory_space<smem>>
    %75 = vector.broadcast %74 : f32 to vector<1x256xf32>
    %76 = arith.addf %69, %75 : vector<1x256xf32>
    %c1_34 = arith.constant 1 : index
    %77 = memref.load %arg6[%c1_34] : memref<4xf32, #tpu.memory_space<smem>>
    %cst_35 = arith.constant 1.000000e+00 : f32
    %78 = arith.addf %77, %cst_35 : f32
    %79 = vector.broadcast %78 : f32 to vector<1x256xf32>
    %80 = arith.addf %73, %79 : vector<1x256xf32>
    %81 = arith.mulf %76, %80 : vector<1x256xf32>
    %c2_36 = arith.constant 2 : index
    %c0_37 = arith.constant 0 : index
    %82 = memref.load %arg3[%c2_36, %c0_37] : memref<4x4xf32, #tpu.memory_space<smem>>
    %83 = vector.broadcast %82 : f32 to vector<1x256xf32>
    %84 = arith.mulf %2, %83 : vector<1x256xf32>
    %c2_38 = arith.constant 2 : index
    %c0_39 = arith.constant 0 : index
    %85 = memref.load %arg5[%c2_38, %c0_39] : memref<4x4xf32, #tpu.memory_space<smem>>
    %86 = vector.broadcast %85 : f32 to vector<1x256xf32>
    %87 = arith.mulf %2, %86 : vector<1x256xf32>
    %c2_40 = arith.constant 2 : index
    %c1_41 = arith.constant 1 : index
    %88 = memref.load %arg3[%c2_40, %c1_41] : memref<4x4xf32, #tpu.memory_space<smem>>
    %89 = vector.broadcast %88 : f32 to vector<1x256xf32>
    %90 = arith.mulf %3, %89 : vector<1x256xf32>
    %91 = arith.addf %84, %90 : vector<1x256xf32>
    %c2_42 = arith.constant 2 : index
    %c1_43 = arith.constant 1 : index
    %92 = memref.load %arg5[%c2_42, %c1_43] : memref<4x4xf32, #tpu.memory_space<smem>>
    %93 = vector.broadcast %92 : f32 to vector<1x256xf32>
    %94 = arith.mulf %3, %93 : vector<1x256xf32>
    %95 = arith.addf %87, %94 : vector<1x256xf32>
    %c2_44 = arith.constant 2 : index
    %c2_45 = arith.constant 2 : index
    %96 = memref.load %arg3[%c2_44, %c2_45] : memref<4x4xf32, #tpu.memory_space<smem>>
    %97 = vector.broadcast %96 : f32 to vector<1x256xf32>
    %98 = arith.mulf %4, %97 : vector<1x256xf32>
    %99 = arith.addf %91, %98 : vector<1x256xf32>
    %c2_46 = arith.constant 2 : index
    %c2_47 = arith.constant 2 : index
    %100 = memref.load %arg5[%c2_46, %c2_47] : memref<4x4xf32, #tpu.memory_space<smem>>
    %101 = vector.broadcast %100 : f32 to vector<1x256xf32>
    %102 = arith.mulf %4, %101 : vector<1x256xf32>
    %103 = arith.addf %95, %102 : vector<1x256xf32>
    %c2_48 = arith.constant 2 : index
    %c3_49 = arith.constant 3 : index
    %104 = memref.load %arg3[%c2_48, %c3_49] : memref<4x4xf32, #tpu.memory_space<smem>>
    %105 = vector.broadcast %104 : f32 to vector<1x256xf32>
    %106 = arith.mulf %5, %105 : vector<1x256xf32>
    %107 = arith.addf %99, %106 : vector<1x256xf32>
    %c2_50 = arith.constant 2 : index
    %c3_51 = arith.constant 3 : index
    %108 = memref.load %arg5[%c2_50, %c3_51] : memref<4x4xf32, #tpu.memory_space<smem>>
    %109 = vector.broadcast %108 : f32 to vector<1x256xf32>
    %110 = arith.mulf %5, %109 : vector<1x256xf32>
    %111 = arith.addf %103, %110 : vector<1x256xf32>
    %c2_52 = arith.constant 2 : index
    %112 = memref.load %arg4[%c2_52] : memref<4xf32, #tpu.memory_space<smem>>
    %113 = vector.broadcast %112 : f32 to vector<1x256xf32>
    %114 = arith.addf %107, %113 : vector<1x256xf32>
    %c2_53 = arith.constant 2 : index
    %115 = memref.load %arg6[%c2_53] : memref<4xf32, #tpu.memory_space<smem>>
    %cst_54 = arith.constant 1.000000e+00 : f32
    %116 = arith.addf %115, %cst_54 : f32
    %117 = vector.broadcast %116 : f32 to vector<1x256xf32>
    %118 = arith.addf %111, %117 : vector<1x256xf32>
    %119 = arith.mulf %114, %118 : vector<1x256xf32>
    %c3_55 = arith.constant 3 : index
    %c0_56 = arith.constant 0 : index
    %120 = memref.load %arg3[%c3_55, %c0_56] : memref<4x4xf32, #tpu.memory_space<smem>>
    %121 = vector.broadcast %120 : f32 to vector<1x256xf32>
    %122 = arith.mulf %2, %121 : vector<1x256xf32>
    %c3_57 = arith.constant 3 : index
    %c0_58 = arith.constant 0 : index
    %123 = memref.load %arg5[%c3_57, %c0_58] : memref<4x4xf32, #tpu.memory_space<smem>>
    %124 = vector.broadcast %123 : f32 to vector<1x256xf32>
    %125 = arith.mulf %2, %124 : vector<1x256xf32>
    %c3_59 = arith.constant 3 : index
    %c1_60 = arith.constant 1 : index
    %126 = memref.load %arg3[%c3_59, %c1_60] : memref<4x4xf32, #tpu.memory_space<smem>>
    %127 = vector.broadcast %126 : f32 to vector<1x256xf32>
    %128 = arith.mulf %3, %127 : vector<1x256xf32>
    %129 = arith.addf %122, %128 : vector<1x256xf32>
    %c3_61 = arith.constant 3 : index
    %c1_62 = arith.constant 1 : index
    %130 = memref.load %arg5[%c3_61, %c1_62] : memref<4x4xf32, #tpu.memory_space<smem>>
    %131 = vector.broadcast %130 : f32 to vector<1x256xf32>
    %132 = arith.mulf %3, %131 : vector<1x256xf32>
    %133 = arith.addf %125, %132 : vector<1x256xf32>
    %c3_63 = arith.constant 3 : index
    %c2_64 = arith.constant 2 : index
    %134 = memref.load %arg3[%c3_63, %c2_64] : memref<4x4xf32, #tpu.memory_space<smem>>
    %135 = vector.broadcast %134 : f32 to vector<1x256xf32>
    %136 = arith.mulf %4, %135 : vector<1x256xf32>
    %137 = arith.addf %129, %136 : vector<1x256xf32>
    %c3_65 = arith.constant 3 : index
    %c2_66 = arith.constant 2 : index
    %138 = memref.load %arg5[%c3_65, %c2_66] : memref<4x4xf32, #tpu.memory_space<smem>>
    %139 = vector.broadcast %138 : f32 to vector<1x256xf32>
    %140 = arith.mulf %4, %139 : vector<1x256xf32>
    %141 = arith.addf %133, %140 : vector<1x256xf32>
    %c3_67 = arith.constant 3 : index
    %c3_68 = arith.constant 3 : index
    %142 = memref.load %arg3[%c3_67, %c3_68] : memref<4x4xf32, #tpu.memory_space<smem>>
    %143 = vector.broadcast %142 : f32 to vector<1x256xf32>
    %144 = arith.mulf %5, %143 : vector<1x256xf32>
    %145 = arith.addf %137, %144 : vector<1x256xf32>
    %c3_69 = arith.constant 3 : index
    %c3_70 = arith.constant 3 : index
    %146 = memref.load %arg5[%c3_69, %c3_70] : memref<4x4xf32, #tpu.memory_space<smem>>
    %147 = vector.broadcast %146 : f32 to vector<1x256xf32>
    %148 = arith.mulf %5, %147 : vector<1x256xf32>
    %149 = arith.addf %141, %148 : vector<1x256xf32>
    %c3_71 = arith.constant 3 : index
    %150 = memref.load %arg4[%c3_71] : memref<4xf32, #tpu.memory_space<smem>>
    %151 = vector.broadcast %150 : f32 to vector<1x256xf32>
    %152 = arith.addf %145, %151 : vector<1x256xf32>
    %c3_72 = arith.constant 3 : index
    %153 = memref.load %arg6[%c3_72] : memref<4xf32, #tpu.memory_space<smem>>
    %cst_73 = arith.constant 1.000000e+00 : f32
    %154 = arith.addf %153, %cst_73 : f32
    %155 = vector.broadcast %154 : f32 to vector<1x256xf32>
    %156 = arith.addf %149, %155 : vector<1x256xf32>
    %157 = arith.mulf %152, %156 : vector<1x256xf32>
    %158 = tpu.concatenate %43, %81, %119, %157 in 0 : vector<1x256xf32>, vector<1x256xf32>, vector<1x256xf32>, vector<1x256xf32> -> vector<4x256xf32>
    %c0_74 = arith.constant 0 : index
    %c0_75 = arith.constant 0 : index
    %c0_76 = arith.constant 0 : index
    %159 = vector.load %arg7[%c0_74, %c0_75, %c0_76] : memref<1x4x256xf32, #tpu.memory_space<vmem>>, vector<1x4x256xf32>
    %160 = vector.shape_cast %159 : vector<1x4x256xf32> to vector<4x256xf32>
    %161 = vector.shape_cast %158 : vector<4x256xf32> to vector<1x4x256xf32>
    tpu.vector_store %arg7[%c0_74, %c0_75, %c0_76], %161 {strides = array<i32>} : memref<1x4x256xf32, #tpu.memory_space<vmem>>, vector<1x4x256xf32>,
    return
  }
  func.func @transform_0(%arg0: i32, %arg1: i32) -> (i32, i32, i32) {
    %c0_i32 = arith.constant 0 : i32
    %c0_i32_0 = arith.constant 0 : i32
    return %arg0, %c0_i32, %arg1 : i32, i32, i32
  }
  func.func @transform_1(%arg0: i32, %arg1: i32) -> (i32, i32) {
    %c0_i32 = arith.constant 0 : i32
    %c0_i32_0 = arith.constant 0 : i32
    %c0_i32_1 = arith.constant 0 : i32
    return %c0_i32, %c0_i32_0 : i32, i32
  }
  func.func @transform_2(%arg0: i32, %arg1: i32) -> i32 {
    %c0_i32 = arith.constant 0 : i32
    %c0_i32_0 = arith.constant 0 : i32
    return %c0_i32 : i32
  }
  func.func @transform_3(%arg0: i32, %arg1: i32) -> (i32, i32) {
    %c0_i32 = arith.constant 0 : i32
    %c0_i32_0 = arith.constant 0 : i32
    %c0_i32_1 = arith.constant 0 : i32
    return %c0_i32, %c0_i32_0 : i32, i32
  }
  func.func @transform_4(%arg0: i32, %arg1: i32) -> i32 {
    %c0_i32 = arith.constant 0 : i32
    %c0_i32_0 = arith.constant 0 : i32
    return %c0_i32 : i32
  }
  func.func @transform_5(%arg0: i32, %arg1: i32) -> (i32, i32, i32) {
    %c0_i32 = arith.constant 0 : i32
    %c0_i32_0 = arith.constant 0 : i32
    return %arg0, %c0_i32, %arg1 : i32, i32, i32
  }
}

</mosaic_0001>

<llo_original>
// kernel: tpu_custom_call.1
$region0: #{tpu_custom_call.1}
  #allocation0 [shape = 'u32[]', space=smem, size = 0x4, offset = 0x4, fixed_abs, tag = 'smem constant byte address 0x4 - core index']
  #allocation1 [shape = 'u32[144,128]{1,0:T(1,128)}', space=vmem, size = 0x12000, scoped, tag = 'internal scratch']
  %s0 = inlined_call_operand.hbm [shape: f32[2,4,256], index: 0, kind: input, shape index: {}]
  %s1 = inlined_call_operand.hbm [shape: f32[4,4], index: 1, kind: input, shape index: {}]
  %s2 = inlined_call_operand.vmem [shape: f32[4], index: 2, kind: input, shape index: {}]
  %s3 = inlined_call_operand.vmem [shape: f32[4,4], index: 3, kind: input, shape index: {}]
  %s4 = inlined_call_operand.vmem [shape: f32[4], index: 4, kind: input, shape index: {}]
  %s5 = inlined_call_operand.hbm [shape: f32[2,4,256], index: 5, kind: output, shape index: {}]
  %s6 = sld [smem:[#allocation0]]
  $region73: #{tpu_custom_call.1} parent=0
    _
  %s8 = ssub.s32 1, %s6
  %s9 = scalar_select 0, %s8, %s6
  $region1: #{tpu_custom_call.1} parent=0
    #allocation2 [shape = 'u8[8192]{0}', space=vmem, size = 0x2000, scoped, tag = 'input window, operand 0']
    #allocation3 [shape = 's32[2]{0}', space=sflag, size = 0x8, scoped, tag = 'scoped memory for tpu_custom_call.1']
    #allocation4 [shape = 's32[2]{0}', space=sflag, size = 0x8, scoped, tag = 'scoped memory for tpu_custom_call.1']
    #allocation5 [shape = 's32[2]{0}', space=sflag, size = 0x8, scoped, tag = 'scoped memory for tpu_custom_call.1']
    #allocation6 [shape = 's32[2]{0}', space=sflag, size = 0x8, scoped, tag = 'scoped memory for tpu_custom_call.1']
    #allocation7 [shape = 'u8[2048]{0}', space=smem, size = 0x800, scoped, tag = 'input window, operand 1, single buffered']
    #allocation8 [shape = 'u8[512]{0}', space=smem, size = 0x200, scoped, tag = 'input window, operand 2, single buffered']
    #allocation9 [shape = 'u8[2048]{0}', space=smem, size = 0x800, scoped, tag = 'input window, operand 3, single buffered']
    #allocation10 [shape = 's32[1]{0}', space=sflag, size = 0x4, scoped, tag = 'scoped memory for tpu_custom_call.1']
    #allocation11 [shape = 'u8[512]{0}', space=smem, size = 0x200, scoped, tag = 'input window, operand 4, single buffered']
    #allocation12 [shape = 'u8[8192]{0}', space=vmem, size = 0x2000, scoped, tag = 'output window, operand 0']
    %10 = vsyncpa [#allocation3], 0
    %s11 = scalar_lea.sflag [#allocation3], 1
    %12 = vsyncpa %s11, 0
    %13 = vsyncpa [#allocation5], 0
    %14 = vsyncpa [#allocation6], 0
    %15 = vsyncpa [#allocation10], 0
    %16 = vsyncpa [#allocation4], 0
    %s17 = scalar_lea.sflag [#allocation4], 1
    %18 = vsyncpa %s17, 0
    loop: start=0, step=1, limit=4
    $region2: #{tpu_custom_call.1} parent=1 // loop_pre_header
      _
    $region3: #{tpu_custom_call.1} parent=1 // loop_header
      %s20 = sphi 0, %s24
      %p21 = scmp.ge.s32.totalorder %s20, 4
      %s27 = sphi 0, %s39
      %s28 = sphi 0, %s35
      %s29 = sphi 0, %s27
      %s30 = sphi 0, %s28
      %s31 = sphi 0, %s29
      %s32 = sphi 0, %s30
      %s44 = sphi 0, %s46
      %s47 = sphi 0, %s44
      %s48 = sphi 0, %s47
      %s64 = sphi 0, %s48
      %s68 = sphi 0, %s68
      %s70 = sphi 0, %s68
      %s71 = sphi 0, %s70
      %s85 = sphi 0, %s71
      %s89 = sphi 0, %s89
      %s91 = sphi 0, %s89
      %s92 = sphi 0, %s91
      %s106 = sphi 0, %s92
      %s110 = sphi 0, %s110
      %s112 = sphi 0, %s110
      %s113 = sphi 0, %s112
      %s127 = sphi 0, %s113
      %s131 = sphi 0, %s131
      %s133 = sphi 0, %s131
      %s134 = sphi 0, %s133
      %s148 = sphi 0, %s134
      %s156 = sphi 0, %s158
      %s159 = sphi 0, %s156
      %s160 = sphi 0, %s159
      %s176 = sphi 0, %s160
    $region4: #{tpu_custom_call.1} parent=1 // loop_header_branch
      %23 = sbr.rel (%p21) target = $region8
    $region5: #{tpu_custom_call.1} parent=1 // loop_body
      %s25 = ssub.s32 %s20, 1
      %s26 = ssub.s32 %s20, 2
      %s33 = sadd.s32 1, %s28
      %p34 = scmp.ge.s32.totalorder %s33, 1
      %s35 = scalar_select %p34, 0, %s33
      %s36 = sadd.s32 1, %s27
      %s37 = scalar_select %p34, %s36, %s27
      %p38 = scmp.ge.s32.totalorder %s37, 2
      %s39 = scalar_select %p38, 0, %s37
      %s40 = ssub.s32 %s27, %s39
      %s41 = ssub.s32 %s28, %s35
      %s42 = sor.u32 %s40, %s41
      %p43 = scmp.eq.s32.totalorder %s42, 0
      %s45 = sadd.s32 %s44, 1
      %s46 = scalar_select %p43, %s44, %s45
      %p49 = pneg %p43
      %p50 = scmp.eq.s32.totalorder %s20, 1
      %p51 = por %p49, %p50
      %p52 = scmp.ne.s32.totalorder %s44, %s47
      %p53 = scmp.eq.s32.totalorder %s20, 0
      %p54 = por %p52, %p53
      %p55 = scmp.ne.s32.totalorder %s44, %s47
      %p56 = scmp.eq.s32.totalorder %s25, 1
      %p57 = por %p55, %p56
      %p58 = scmp.ne.s32.totalorder %s47, %s48
      %p59 = scmp.eq.s32.totalorder %s25, 0
      %p60 = por %p58, %p59
      %p61 = scmp.ne.s32.totalorder %s47, %s48
      %p62 = scmp.eq.s32.totalorder %s26, 1
      %p63 = por %p61, %p62
      %p65 = scmp.ne.s32.totalorder %s48, %s64
      %p66 = scmp.eq.s32.totalorder %s26, 0
      %p67 = por %p65, %p66
      %s69 = sadd.s32 %s68, 1
      %p72 = scmp.eq.s32.totalorder %s20, 1
      %p73 = scmp.ne.s32.totalorder %s68, %s70
      %p74 = scmp.eq.s32.totalorder %s20, 0
      %p75 = por %p73, %p74
      %p76 = scmp.ne.s32.totalorder %s68, %s70
      %p77 = scmp.eq.s32.totalorder %s25, 1
      %p78 = por %p76, %p77
      %p79 = scmp.ne.s32.totalorder %s70, %s71
      %p80 = scmp.eq.s32.totalorder %s25, 0
      %p81 = por %p79, %p80
      %p82 = scmp.ne.s32.totalorder %s70, %s71
      %p83 = scmp.eq.s32.totalorder %s26, 1
      %p84 = por %p82, %p83
      %p86 = scmp.ne.s32.totalorder %s71, %s85
      %p87 = scmp.eq.s32.totalorder %s26, 0
      %p88 = por %p86, %p87
      %s90 = sadd.s32 %s89, 1
      %p93 = scmp.eq.s32.totalorder %s20, 1
      %p94 = scmp.ne.s32.totalorder %s89, %s91
      %p95 = scmp.eq.s32.totalorder %s20, 0
      %p96 = por %p94, %p95
      %p97 = scmp.ne.s32.totalorder %s89, %s91
      %p98 = scmp.eq.s32.totalorder %s25, 1
      %p99 = por %p97, %p98
      %p100 = scmp.ne.s32.totalorder %s91, %s92
      %p101 = scmp.eq.s32.totalorder %s25, 0
      %p102 = por %p100, %p101
      %p103 = scmp.ne.s32.totalorder %s91, %s92
      %p104 = scmp.eq.s32.totalorder %s26, 1
      %p105 = por %p103, %p104
      %p107 = scmp.ne.s32.totalorder %s92, %s106
      %p108 = scmp.eq.s32.totalorder %s26, 0
      %p109 = por %p107, %p108
      %s111 = sadd.s32 %s110, 1
      %p114 = scmp.eq.s32.totalorder %s20, 1
      %p115 = scmp.ne.s32.totalorder %s110, %s112
      %p116 = scmp.eq.s32.totalorder %s20, 0
      %p117 = por %p115, %p116
      %p118 = scmp.ne.s32.totalorder %s110, %s112
      %p119 = scmp.eq.s32.totalorder %s25, 1
      %p120 = por %p118, %p119
      %p121 = scmp.ne.s32.totalorder %s112, %s113
      %p122 = scmp.eq.s32.totalorder %s25, 0
      %p123 = por %p121, %p122
      %p124 = scmp.ne.s32.totalorder %s112, %s113
      %p125 = scmp.eq.s32.totalorder %s26, 1
      %p126 = por %p124, %p125
      %p128 = scmp.ne.s32.totalorder %s113, %s127
      %p129 = scmp.eq.s32.totalorder %s26, 0
      %p130 = por %p128, %p129
      %s132 = sadd.s32 %s131, 1
      %p135 = scmp.eq.s32.totalorder %s20, 1
      %p136 = scmp.ne.s32.totalorder %s131, %s133
      %p137 = scmp.eq.s32.totalorder %s20, 0
      %p138 = por %p136, %p137
      %p139 = scmp.ne.s32.totalorder %s131, %s133
      %p140 = scmp.eq.s32.totalorder %s25, 1
      %p141 = por %p139, %p140
      %p142 = scmp.ne.s32.totalorder %s133, %s134
      %p143 = scmp.eq.s32.totalorder %s25, 0
      %p144 = por %p142, %p143
      %p145 = scmp.ne.s32.totalorder %s133, %s134
      %p146 = scmp.eq.s32.totalorder %s26, 1
      %p147 = por %p145, %p146
      %p149 = scmp.ne.s32.totalorder %s134, %s148
      %p150 = scmp.eq.s32.totalorder %s26, 0
      %p151 = por %p149, %p150
      %s152 = ssub.s32 %s27, %s39
      %s153 = ssub.s32 %s28, %s35
      %s154 = sor.u32 %s152, %s153
      %p155 = scmp.eq.s32.totalorder %s154, 0
      %s157 = sadd.s32 %s156, 1
      %s158 = scalar_select %p155, %s156, %s157
      %p161 = pneg %p155
      %p162 = scmp.eq.s32.totalorder %s20, 1
      %p163 = por %p161, %p162
      %p164 = scmp.ne.s32.totalorder %s156, %s159
      %p165 = scmp.eq.s32.totalorder %s20, 0
      %p166 = por %p164, %p165
      %p167 = scmp.ne.s32.totalorder %s156, %s159
      %p168 = scmp.eq.s32.totalorder %s25, 1
      %p169 = por %p167, %p168
      %p170 = scmp.ne.s32.totalorder %s159, %s160
      %p171 = scmp.eq.s32.totalorder %s25, 0
      %p172 = por %p170, %p171
      %p173 = scmp.ne.s32.totalorder %s159, %s160
      %p174 = scmp.eq.s32.totalorder %s26, 1
      %p175 = por %p173, %p174
      %p177 = scmp.ne.s32.totalorder %s160, %s176
      %p178 = scmp.eq.s32.totalorder %s26, 0
      %p179 = por %p177, %p178
      %p180 = scmp.le.s32.totalorder 1, %s20
      %p181 = scmp.lt.s32.totalorder %s20, 3
      %p182 = pnand %p180, %p181
      %p183 = pneg %p182
      // Predicated region
      $region9: #{tpu_custom_call.1} parent=5 // pred_check
        _
      $region10: #{tpu_custom_call.1} parent=5 // pred_check_branch
        %185 = sbr.rel (%p182) target = $region12
      $region11: #{tpu_custom_call.1} parent=5 // pred_region
        %s186 = ssub.s32 %s20, 1
        // Predicated region
        $region13: #{tpu_custom_call.1} parent=11 // pred_check
          %p187 = pneg %p81
        $region14: #{tpu_custom_call.1} parent=11 // pred_check_branch
          %189 = sbr.rel (%p187) target = $region16
        $region15: #{tpu_custom_call.1} parent=11 // pred_region
          %s191 = ssub.s32 64, 64
          %192 = vsyncadd [#allocation5], %s191
          %195 = dma.hbm_to_smem %s1, 64, [#allocation7], [#allocation5]
        $region16: #{tpu_custom_call.1} parent=11 // pred_fallthru
          _
        // Predicated region
        $region17: #{tpu_custom_call.1} parent=11 // pred_check
          %p196 = pneg %p102
        $region18: #{tpu_custom_call.1} parent=11 // pred_check_branch
          %198 = sbr.rel (%p196) target = $region20
        $region19: #{tpu_custom_call.1} parent=11 // pred_region
          %s200 = ssub.s32 16, 16
          %201 = vsyncadd [#allocation6], %s200
          %s203 = sshll.u32 %s2, 4
          %s204 = int_to_ptr.vmem [resolvable:$true] %s203
          %206 = dma.vmem_to_smem %s204, 16, [#allocation8], [#allocation6]
        $region20: #{tpu_custom_call.1} parent=11 // pred_fallthru
          _
        // Predicated region
        $region21: #{tpu_custom_call.1} parent=11 // pred_check
          %p207 = pneg %p123
        $region22: #{tpu_custom_call.1} parent=11 // pred_check_branch
          %209 = sbr.rel (%p207) target = $region24
        $region23: #{tpu_custom_call.1} parent=11 // pred_region
          %s211 = ssub.s32 64, 64
          %212 = vsyncadd [#allocation10], %s211
          %s214 = sshll.u32 %s3, 4
          %s215 = int_to_ptr.vmem [resolvable:$true] %s214
          %217 = dma.vmem_to_smem %s215, 64, [#allocation9], [#allocation10]
        $region24: #{tpu_custom_call.1} parent=11 // pred_fallthru
          _
        // Predicated region
        $region25: #{tpu_custom_call.1} parent=11 // pred_check
          %p218 = pneg %p144
        $region26: #{tpu_custom_call.1} parent=11 // pred_check_branch
          %220 = sbr.rel (%p218) target = $region28
        $region27: #{tpu_custom_call.1} parent=11 // pred_region
          %s222 = ssub.s32 16, 16
          %223 = vsyncadd [#allocation10], %s222
          %s225 = sshll.u32 %s4, 4
          %s226 = int_to_ptr.vmem [resolvable:$true] %s225
          %228 = dma.vmem_to_smem %s226, 16, [#allocation11], [#allocation10]
        $region28: #{tpu_custom_call.1} parent=11 // pred_fallthru
          _
      $region12: #{tpu_custom_call.1} parent=5 // pred_fallthru
        _
      %p229 = scmp.lt.s32.totalorder %s20, 2
      // Predicated region
      $region29: #{tpu_custom_call.1} parent=5 // pred_check
        %p230 = pneg %p229
      $region30: #{tpu_custom_call.1} parent=5 // pred_check_branch
        %232 = sbr.rel (%p230) target = $region32
      $region31: #{tpu_custom_call.1} parent=5 // pred_region
        // Predicated region
        $region33: #{tpu_custom_call.1} parent=31 // pred_check
          %p233 = pneg %p54
        $region34: #{tpu_custom_call.1} parent=31 // pred_check_branch
          %235 = sbr.rel (%p233) target = $region36
        $region35: #{tpu_custom_call.1} parent=31 // pred_region
          %s236 = sand.u32 %s44, 1
          %s237 = scalar_lea.sflag [#allocation3], %s236
          %s238 = sand.u32 %s44, 1
          %s239 = smul.addr %s238, 8
          %s240 = scalar_lea.vmem [#allocation2], %s239
          %s241 = smul.u32 2, %s28
          %s243 = ssub.s32 128, 128
          %244 = vsyncadd %s237, %s243
          %s245 = smul.addr %s27, 2
          %s246 = sadd.s32 %s241, %s245
          %s247 = smul.addr %s246, 64
          %s248 = scalar_lea.hbm %s0, %s247
          %s250 = sshll.u32 %s240, 4
          %s251 = int_to_ptr.vmem [resolvable:$true] %s250
          %253 = dma.hbm_to_vmem [thread:$0]  %s248, 128, %s251, %s237
        $region36: #{tpu_custom_call.1} parent=31 // pred_fallthru
          _
      $region32: #{tpu_custom_call.1} parent=5 // pred_fallthru
        _
      %p254 = scmp.le.s32.totalorder 1, %s20
      %p255 = scmp.lt.s32.totalorder %s20, 3
      %p256 = pnand %p254, %p255
      %p257 = pneg %p256
      // Predicated region
      $region37: #{tpu_custom_call.1} parent=5 // pred_check
        _
      $region38: #{tpu_custom_call.1} parent=5 // pred_check_branch
        %259 = sbr.rel (%p256) target = $region40
      $region39: #{tpu_custom_call.1} parent=5 // pred_region
        %s260 = ssub.s32 %s20, 1
        %s261 = sand.u32 %s47, 1
        %s262 = scalar_lea.sflag [#allocation3], %s261
        %s263 = sand.u32 %s47, 1
        %s264 = smul.addr %s263, 8
        %s265 = scalar_lea.vmem [#allocation2], %s264
        // Predicated region
        $region41: #{tpu_custom_call.1} parent=39 // pred_check
          %p266 = pneg %p60
        $region42: #{tpu_custom_call.1} parent=39 // pred_check_branch
          %268 = sbr.rel (%p266) target = $region44
        $region43: #{tpu_custom_call.1} parent=39 // pred_region
          %269 = dma.done %s262, 128
        $region44: #{tpu_custom_call.1} parent=39 // pred_fallthru
          _
        // Predicated region
        $region45: #{tpu_custom_call.1} parent=39 // pred_check
          %p270 = pneg %p81
        $region46: #{tpu_custom_call.1} parent=39 // pred_check_branch
          %272 = sbr.rel (%p270) target = $region48
        $region47: #{tpu_custom_call.1} parent=39 // pred_region
          %273 = dma.done [#allocation5], 64
        $region48: #{tpu_custom_call.1} parent=39 // pred_fallthru
          _
        // Predicated region
        $region49: #{tpu_custom_call.1} parent=39 // pred_check
          %p274 = pneg %p102
        $region50: #{tpu_custom_call.1} parent=39 // pred_check_branch
          %276 = sbr.rel (%p274) target = $region52
        $region51: #{tpu_custom_call.1} parent=39 // pred_region
          %277 = dma.done [#allocation6], 16
        $region52: #{tpu_custom_call.1} parent=39 // pred_fallthru
          _
        // Predicated region
        $region53: #{tpu_custom_call.1} parent=39 // pred_check
          %p278 = pneg %p123
        $region54: #{tpu_custom_call.1} parent=39 // pred_check_branch
          %280 = sbr.rel (%p278) target = $region56
        $region55: #{tpu_custom_call.1} parent=39 // pred_region
          %281 = dma.done [#allocation10], 64
        $region56: #{tpu_custom_call.1} parent=39 // pred_fallthru
          _
        // Predicated region
        $region57: #{tpu_custom_call.1} parent=39 // pred_check
          %p282 = pneg %p144
        $region58: #{tpu_custom_call.1} parent=39 // pred_check_branch
          %284 = sbr.rel (%p282) target = $region60
        $region59: #{tpu_custom_call.1} parent=39 // pred_region
          %285 = dma.done [#allocation10], 16
        $region60: #{tpu_custom_call.1} parent=39 // pred_fallthru
          _
        %286 = sfence
        %s287 = sand.u32 %s47, 1
        %s288 = scalar_lea.sflag [#allocation3], %s287
        %s289 = sand.u32 %s47, 1
        %s290 = smul.addr %s289, 8
        %s291 = scalar_lea.vmem [#allocation2], %s290
        %p292 = pneg %p60
        %p293 = pneg %p57
        %p294 = pneg %p81
        %p295 = pneg %p78
        %p296 = pneg %p102
        %p297 = pneg %p99
        %p298 = pneg %p123
        %p299 = pneg %p120
        %p300 = pneg %p144
        %p301 = pneg %p141
        %p302 = pneg %p172
        %p303 = pneg %p169
        %s304 = sand.u32 %s159, 1
        %s305 = scalar_lea.sflag [#allocation4], %s304
        %s306 = sand.u32 %s159, 1
        %s307 = smul.addr %s306, 8
        %s308 = scalar_lea.vmem [#allocation12], %s307
        %s309 = smul.u32 2, %s30
        %s310 = smul.u32 2, %s30
        %v311 = vld [vmem:[%s265] sm:$0xff]
        %s312 = sld [smem:[#allocation7]]
        %v313 = vstv %s312
        %v314 = vmul.f32 %v311, %v313
        %s315 = sld [smem:[#allocation9]]
        %v316 = vstv %s315
        %v317 = vmul.f32 %v311, %v316
        %s318 = sld [smem:[#allocation7 + $0x1]]
        %v319 = vstv %s318
        %v320 = vmul.f32 %v311, %v319
        %v322 = vrot.slane %v320, 5
        %v323 = vrot.slane %v322, 4
        %v325 = vadd.f32 %v314, %v323
        %s326 = sld [smem:[#allocation9 + $0x1]]
        %v327 = vstv %s326
        %v328 = vmul.f32 %v311, %v327
        %v330 = vrot.slane %v328, 5
        %v331 = vrot.slane %v330, 4
        %v333 = vadd.f32 %v317, %v331
        %s334 = sld [smem:[#allocation7 + $0x2]]
        %v335 = vstv %s334
        %v336 = vmul.f32 %v311, %v335
        %v338 = vrot.slane %v336, 6
        %v339 = vrot.slane %v338, 4
        %v341 = vadd.f32 %v325, %v339
        %s342 = sld [smem:[#allocation9 + $0x2]]
        %v343 = vstv %s342
        %v344 = vmul.f32 %v311, %v343
        %v346 = vrot.slane %v344, 6
        %v347 = vrot.slane %v346, 4
        %v349 = vadd.f32 %v333, %v347
        %s350 = sld [smem:[#allocation7 + $0x3]]
        %v351 = vstv %s350
        %v352 = vmul.f32 %v311, %v351
        %v354 = vrot.slane %v352, 7
        %v355 = vrot.slane %v354, 4
        %v357 = vadd.f32 %v341, %v355
        %s358 = sld [smem:[#allocation9 + $0x3]]
        %v359 = vstv %s358
        %v360 = vmul.f32 %v311, %v359
        %v362 = vrot.slane %v360, 7
        %v363 = vrot.slane %v362, 4
        %v365 = vadd.f32 %v349, %v363
        %s366 = sld [smem:[#allocation8]]
        %v367 = vstv %s366
        %v368 = vadd.f32 %v357, %v367
        %s369 = sld [smem:[#allocation11]]
        %s370 = sadd.f32 %s369, 1.0
        %v371 = vstv %s370
        %v372 = vadd.f32 %v365, %v371
        %v373 = vmul.f32 %v368, %v372
        %s374 = sld [smem:[#allocation7 + $0x80]]
        %v375 = vstv %s374
        %v376 = vmul.f32 %v311, %v375
        %s377 = sld [smem:[#allocation9 + $0x80]]
        %v378 = vstv %s377
        %v379 = vmul.f32 %v311, %v378
        %s380 = sld [smem:[#allocation7 + $0x81]]
        %v381 = vstv %s380
        %v382 = vmul.f32 %v311, %v381
        %v384 = vrot.slane %v382, 5
        %v385 = vrot.slane %v384, 4
        %v387 = vadd.f32 %v376, %v385
        %s388 = sld [smem:[#allocation9 + $0x81]]
        %v389 = vstv %s388
        %v390 = vmul.f32 %v311, %v389
        %v392 = vrot.slane %v390, 5
        %v393 = vrot.slane %v392, 4
        %v395 = vadd.f32 %v379, %v393
        %s396 = sld [smem:[#allocation7 + $0x82]]
        %v397 = vstv %s396
        %v398 = vmul.f32 %v311, %v397
        %v400 = vrot.slane %v398, 6
        %v401 = vrot.slane %v400, 4
        %v403 = vadd.f32 %v387, %v401
        %s404 = sld [smem:[#allocation9 + $0x82]]
        %v405 = vstv %s404
        %v406 = vmul.f32 %v311, %v405
        %v408 = vrot.slane %v406, 6
        %v409 = vrot.slane %v408, 4
        %v411 = vadd.f32 %v395, %v409
        %s412 = sld [smem:[#allocation7 + $0x83]]
        %v413 = vstv %s412
        %v414 = vmul.f32 %v311, %v413
        %v416 = vrot.slane %v414, 7
        %v417 = vrot.slane %v416, 4
        %v419 = vadd.f32 %v403, %v417
        %s420 = sld [smem:[#allocation9 + $0x83]]
        %v421 = vstv %s420
        %v422 = vmul.f32 %v311, %v421
        %v424 = vrot.slane %v422, 7
        %v425 = vrot.slane %v424, 4
        %v427 = vadd.f32 %v411, %v425
        %s428 = sld [smem:[#allocation8 + $0x1]]
        %v429 = vstv %s428
        %v430 = vadd.f32 %v419, %v429
        %s431 = sld [smem:[#allocation11 + $0x1]]
        %s432 = sadd.f32 %s431, 1.0
        %v433 = vstv %s432
        %v434 = vadd.f32 %v427, %v433
        %v435 = vmul.f32 %v430, %v434
        %s436 = sld [smem:[#allocation7 + $0x100]]
        %v437 = vstv %s436
        %v438 = vmul.f32 %v311, %v437
        %s439 = sld [smem:[#allocation9 + $0x100]]
        %v440 = vstv %s439
        %v441 = vmul.f32 %v311, %v440
        %s442 = sld [smem:[#allocation7 + $0x101]]
        %v443 = vstv %s442
        %v444 = vmul.f32 %v311, %v443
        %v446 = vrot.slane %v444, 5
        %v447 = vrot.slane %v446, 4
        %v449 = vadd.f32 %v438, %v447
        %s450 = sld [smem:[#allocation9 + $0x101]]
        %v451 = vstv %s450
        %v452 = vmul.f32 %v311, %v451
        %v454 = vrot.slane %v452, 5
        %v455 = vrot.slane %v454, 4
        %v457 = vadd.f32 %v441, %v455
        %s458 = sld [smem:[#allocation7 + $0x102]]
        %v459 = vstv %s458
        %v460 = vmul.f32 %v311, %v459
        %v462 = vrot.slane %v460, 6
        %v463 = vrot.slane %v462, 4
        %v465 = vadd.f32 %v449, %v463
        %s466 = sld [smem:[#allocation9 + $0x102]]
        %v467 = vstv %s466
        %v468 = vmul.f32 %v311, %v467
        %v470 = vrot.slane %v468, 6
        %v471 = vrot.slane %v470, 4
        %v473 = vadd.f32 %v457, %v471
        %s474 = sld [smem:[#allocation7 + $0x103]]
        %v475 = vstv %s474
        %v476 = vmul.f32 %v311, %v475
        %v478 = vrot.slane %v476, 7
        %v479 = vrot.slane %v478, 4
        %v481 = vadd.f32 %v465, %v479
        %s482 = sld [smem:[#allocation9 + $0x103]]
        %v483 = vstv %s482
        %v484 = vmul.f32 %v311, %v483
        %v486 = vrot.slane %v484, 7
        %v487 = vrot.slane %v486, 4
        %v489 = vadd.f32 %v473, %v487
        %s490 = sld [smem:[#allocation8 + $0x2]]
        %v491 = vstv %s490
        %v492 = vadd.f32 %v481, %v491
        %s493 = sld [smem:[#allocation11 + $0x2]]
        %s494 = sadd.f32 %s493, 1.0
        %v495 = vstv %s494
        %v496 = vadd.f32 %v489, %v495
        %v497 = vmul.f32 %v492, %v496
        %s498 = sld [smem:[#allocation7 + $0x180]]
        %v499 = vstv %s498
        %v500 = vmul.f32 %v311, %v499
        %s501 = sld [smem:[#allocation9 + $0x180]]
        %v502 = vstv %s501
        %v503 = vmul.f32 %v311, %v502
        %s504 = sld [smem:[#allocation7 + $0x181]]
        %v505 = vstv %s504
        %v506 = vmul.f32 %v311, %v505
        %v508 = vrot.slane %v506, 5
        %v509 = vrot.slane %v508, 4
        %v511 = vadd.f32 %v500, %v509
        %s512 = sld [smem:[#allocation9 + $0x181]]
        %v513 = vstv %s512
        %v514 = vmul.f32 %v311, %v513
        %v516 = vrot.slane %v514, 5
        %v517 = vrot.slane %v516, 4
        %v519 = vadd.f32 %v503, %v517
        %s520 = sld [smem:[#allocation7 + $0x182]]
        %v521 = vstv %s520
        %v522 = vmul.f32 %v311, %v521
        %v524 = vrot.slane %v522, 6
        %v525 = vrot.slane %v524, 4
        %v527 = vadd.f32 %v511, %v525
        %s528 = sld [smem:[#allocation9 + $0x182]]
        %v529 = vstv %s528
        %v530 = vmul.f32 %v311, %v529
        %v532 = vrot.slane %v530, 6
        %v533 = vrot.slane %v532, 4
        %v535 = vadd.f32 %v519, %v533
        %s536 = sld [smem:[#allocation7 + $0x183]]
        %v537 = vstv %s536
        %v538 = vmul.f32 %v311, %v537
        %v540 = vrot.slane %v538, 7
        %v541 = vrot.slane %v540, 4
        %v543 = vadd.f32 %v527, %v541
        %s544 = sld [smem:[#allocation9 + $0x183]]
        %v545 = vstv %s544
        %v546 = vmul.f32 %v311, %v545
        %v548 = vrot.slane %v546, 7
        %v549 = vrot.slane %v548, 4
        %v551 = vadd.f32 %v535, %v549
        %s552 = sld [smem:[#allocation8 + $0x3]]
        %v553 = vstv %s552
        %v554 = vadd.f32 %v543, %v553
        %s555 = sld [smem:[#allocation11 + $0x3]]
        %s556 = sadd.f32 %s555, 1.0
        %v557 = vstv %s556
        %v558 = vadd.f32 %v551, %v557
        %v559 = vmul.f32 %v554, %v558
        %v561 = vlaneseq
        %v562 = vshrl.u32 %v561, 7
        %v563 = vsub.s32 0, %v562
        %v564 = vrot.slane %v373, %v563
        %v565 = vlaneseq
        %v566 = vshrl.u32 %v565, 7
        %v567 = vsub.s32 4, %v566
        %v568 = vrot.slane %v373, %v567
        %v572 = vlaneseq
        %v573 = vshrl.u32 %v572, 7
        %v574 = vsub.s32 0, %v573
        %v575 = vrot.slane %v435, %v574
        %v576 = vlaneseq
        %v577 = vshrl.u32 %v576, 7
        %v578 = vsub.s32 4, %v577
        %v579 = vrot.slane %v435, %v578
        %v583 = vlaneseq
        %v584 = vshrl.u32 %v583, 7
        %v585 = vsub.s32 0, %v584
        %v586 = vrot.slane %v497, %v585
        %v587 = vlaneseq
        %v588 = vshrl.u32 %v587, 7
        %v589 = vsub.s32 4, %v588
        %v590 = vrot.slane %v497, %v589
        %v594 = vlaneseq
        %v595 = vshrl.u32 %v594, 7
        %v596 = vsub.s32 0, %v595
        %v597 = vrot.slane %v559, %v596
        %v598 = vlaneseq
        %v599 = vshrl.u32 %v598, 7
        %v600 = vsub.s32 4, %v599
        %v601 = vrot.slane %v559, %v600
        %vm604 = vcmask 1040384
        %v605 = vsel %vm604, %v564, %v575
        %v606 = vsel %vm604, %v568, %v579
        %vm607 = vcmask 1041408
        %v608 = vsel %vm607, %v605, %v586
        %v609 = vsel %vm607, %v606, %v590
        %vm610 = vcmask 1042432
        %v611 = vsel %vm610, %v608, %v597
        %v612 = vsel %vm610, %v609, %v601
        %v615 = vcombine.low %v611, %v612
        %617 = vst [vmem:[%s308] sm:$0xff] %v615
        %s618 = sand.u32 %s159, 1
        %s619 = scalar_lea.sflag [#allocation4], %s618
        %s620 = sand.u32 %s159, 1
        %s621 = smul.addr %s620, 8
        %s622 = scalar_lea.vmem [#allocation12], %s621
        // Predicated region
        $region61: #{tpu_custom_call.1} parent=39 // pred_check
          %p623 = pneg %p169
        $region62: #{tpu_custom_call.1} parent=39 // pred_check_branch
          %625 = sbr.rel (%p623) target = $region64
        $region63: #{tpu_custom_call.1} parent=39 // pred_region
          %s626 = smul.u32 2, %s30
          %s628 = ssub.s32 128, 128
          %629 = vsyncadd %s619, %s628
          %s630 = smul.addr %s29, 2
          %s631 = sadd.s32 %s626, %s630
          %s632 = smul.addr %s631, 64
          %s633 = scalar_lea.hbm %s5, %s632
          %s635 = sshll.u32 %s622, 4
          %s636 = int_to_ptr.vmem [resolvable:$true] %s635
          %638 = dma.vmem_to_hbm [thread:$0]  %s636, 128, %s633, %s619
        $region64: #{tpu_custom_call.1} parent=39 // pred_fallthru
          _
      $region40: #{tpu_custom_call.1} parent=5 // pred_fallthru
        _
      %p639 = scmp.le.s32.totalorder 2, %s20
      // Predicated region
      $region65: #{tpu_custom_call.1} parent=5 // pred_check
        %p640 = pneg %p639
      $region66: #{tpu_custom_call.1} parent=5 // pred_check_branch
        %642 = sbr.rel (%p640) target = $region68
      $region67: #{tpu_custom_call.1} parent=5 // pred_region
        %s643 = ssub.s32 %s20, 2
        // Predicated region
        $region69: #{tpu_custom_call.1} parent=67 // pred_check
          %p644 = pneg %p175
        $region70: #{tpu_custom_call.1} parent=67 // pred_check_branch
          %646 = sbr.rel (%p644) target = $region72
        $region71: #{tpu_custom_call.1} parent=67 // pred_region
          %s647 = sand.u32 %s160, 1
          %s648 = scalar_lea.sflag [#allocation4], %s647
          %s649 = sand.u32 %s160, 1
          %s650 = smul.addr %s649, 8
          %s651 = scalar_lea.vmem [#allocation12], %s650
          %652 = dma.done %s648, 128
        $region72: #{tpu_custom_call.1} parent=67 // pred_fallthru
          _
      $region68: #{tpu_custom_call.1} parent=5 // pred_fallthru
        _
    $region6: #{tpu_custom_call.1} parent=1 // loop_footer
      %s24 = sadd.s32 1, %s20
    $region7: #{tpu_custom_call.1} parent=1 // loop_footer_branch
      %19 = sbr.rel target = $region3
    $region8: #{tpu_custom_call.1} parent=1 // loop_exit
      _
    %653 = vsyncpa [#allocation3], 1
    %s654 = scalar_lea.sflag [#allocation3], 1
    %655 = vsyncpa %s654, 1
    %656 = vsyncpa [#allocation4], 1
    %s657 = scalar_lea.sflag [#allocation4], 1
    %658 = vsyncpa %s657, 1
    %659 = vsyncpa [#allocation5], 1
    %s660 = scalar_lea.sflag [#allocation5], 1
    %661 = vsyncpa %s660, 1
    %662 = vsyncpa [#allocation6], 1
    %s663 = scalar_lea.sflag [#allocation6], 1
    %664 = vsyncpa %s663, 1
    %665 = vsyncpa [#allocation10], 1

</llo_original>
